<compile_context>
chip_gen: v7x
topology: tpu7x:2x2x1
jax: 0.10.0
libtpu: 0.0.40
codegen_flags: <defaults>
</compile_context>

<pallas_src>
import functools
import math

import jax
import jax.numpy as jnp
from jax.experimental import pallas as pl
from jax.experimental.pallas import tpu as pltpu


_SQRT_2 = math.sqrt(2.0)
_SQRT_2_OVER_PI = math.sqrt(2.0 / math.pi)


def _activation(y, act):
    """Activation applied in f32 in the kernel epilogue (static selection)."""
    if act == "gelu":        # exact erf-based GELU (HF 'gelu')
        return 0.5 * y * (1.0 + jax.lax.erf(y / _SQRT_2))
    if act == "gelu_new":    # tanh approximation
        return 0.5 * y * (1.0 + jnp.tanh(_SQRT_2_OVER_PI * (y + 0.044715 * (y ** 3))))
    if act == "relu":
        return jnp.maximum(y, 0.0)
    if act == "swish":
        return y * jax.nn.sigmoid(y)
    if act == "mish":
        return y * jnp.tanh(jax.nn.softplus(y))
    raise ValueError(f"unsupported activation: {act}")
    # TODO(synk): config.hidden_act given as an arbitrary Python callable (non-string)
    # cannot be lowered into the kernel; only the ACT2FN string variants are supported.


def bert_intermediate_kernel(x_ref, w_ref, b_ref, o_ref, acc_ref, *, act):
    k = pl.program_id(2)

    @pl.when(k == 0)
    def _():
        acc_ref[...] = jnp.zeros_like(acc_ref)

    # bf16 x bf16 -> f32 accumulation on the MXU.
    acc_ref[...] += jnp.dot(x_ref[...], w_ref[...],
                            preferred_element_type=jnp.float32)

    @pl.when(k == pl.num_programs(2) - 1)
    def _():
        y = acc_ref[...] + b_ref[...]            # (1, tn) f32 bias broadcast
        o_ref[...] = _activation(y, act).astype(o_ref.dtype)


def _pick_tile(dim, target, quantum):
    """Largest tile <= target that is a multiple of `quantum` and divides `dim`.
    Falls back to the full dim (full-extent blocks are always layout-legal)."""
    if dim <= target:
        return dim
    t = (target // quantum) * quantum
    while t >= quantum:
        if dim % t == 0:
            return t
        t -= quantum
    return dim


def bert_intermediate(x, w, b, *, act="gelu", tm=256, tk=512, tn=512):
    """y = act(x @ w + b).

    x: (B, S, H)  activations (any float dtype; cast to bf16 for the MXU)
    w: (H, I)     pre-transposed torch Linear weight (torch stores (I, H))
    b: (I,)       bias
    returns (B, S, I) in x.dtype
    """
    B, S, H = x.shape
    I = w.shape[1]
    M = B * S

    tm = _pick_tile(M, tm, 8)
    tk = _pick_tile(H, tk, 128)
    tn = _pick_tile(I, tn, 128)

    x2 = x.reshape(M, H).astype(jnp.bfloat16)     # bf16 MXU operand
    w2 = w.astype(jnp.bfloat16)
    b2 = b.reshape(1, I).astype(jnp.float32)      # 2-D lane-major f32 bias

    grid = (M // tm, I // tn, H // tk)
    kernel = functools.partial(bert_intermediate_kernel, act=act)

    cost = pl.CostEstimate(
        flops=2 * M * H * I,
        transcendentals=M * I,
        bytes_accessed=(x2.size * 2 + w2.size * 2 + b2.size * 4
                        + M * I * x.dtype.itemsize),
    )

    out2d = pl.pallas_call(
        kernel,
        out_shape=jax.ShapeDtypeStruct((M, I), x.dtype),
        grid_spec=pltpu.PrefetchScalarGridSpec(
            num_scalar_prefetch=0,
            grid=grid,
            in_specs=[
                pl.BlockSpec((tm, tk), lambda i, j, k: (i, k)),   # x tile
                pl.BlockSpec((tk, tn), lambda i, j, k: (k, j)),   # weight tile
                pl.BlockSpec((1, tn), lambda i, j, k: (0, j)),    # bias tile (k-invariant)
            ],
            out_specs=pl.BlockSpec((tm, tn), lambda i, j, k: (i, j)),
            scratch_shapes=[pltpu.VMEM((tm, tn), jnp.float32)],   # f32 accumulator
        ),
        compiler_params=pltpu.CompilerParams(
            dimension_semantics=("parallel", "parallel", "arbitrary"),
            vmem_limit_bytes=64 * 1024 * 1024,
        ),
        cost_estimate=cost,
    )(x2, w2, b2)

    return out2d.reshape(B, S, I)


if __name__ == "__main__":
    # small config: batch=2, seq=8, hidden=32, intermediate=64
    B, S, H, I = 2, 8, 32, 64

    key = jax.random.PRNGKey(0)
    kx, kw, kb = jax.random.split(key, 3)

    x = jax.random.normal(kx, (B, S, H), jnp.float32)
    # torch Linear weight is (I, H); store it pre-transposed as (H, I).
    w = jax.random.normal(kw, (H, I), jnp.float32) * 0.02
    b = jax.random.normal(kb, (I,), jnp.float32) * 0.02

    out = bert_intermediate(x, w, b, act="gelu")
    jax.block_until_ready(out)
    assert out.shape == (B, S, I)

    # pure-JAX reference with the same bf16 operands / f32 accumulation
    ref = jnp.dot(x.astype(jnp.bfloat16), w.astype(jnp.bfloat16),
                  preferred_element_type=jnp.float32) + b
    ref = 0.5 * ref * (1.0 + jax.lax.erf(ref / jnp.float32(_SQRT_2)))
    assert jnp.allclose(out, ref.astype(out.dtype), rtol=2e-2, atol=2e-2)

    print("KERNEL_OK")
</pallas_src>

<mosaic_0001>
module attributes {stable_mosaic.version = 11 : i64} {
  func.func @bert_intermediate_kernel(%arg0: i32, %arg1: i32, %arg2: i32, %arg3: memref<16x32xbf16, #tpu.memory_space<vmem>>, %arg4: memref<32x64xbf16, #tpu.memory_space<vmem>>, %arg5: memref<1x64xf32, #tpu.memory_space<vmem>>, %arg6: memref<16x64xf32, #tpu.memory_space<vmem>>, %arg7: memref<16x64xf32, #tpu.memory_space<vmem>>) attributes {dimension_semantics = [#tpu.dimension_semantics<parallel>, #tpu.dimension_semantics<parallel>, #tpu.dimension_semantics<arbitrary>], iteration_bounds = array<i64: 1, 1, 1>, scalar_prefetch = 0 : i64, scratch_operands = 1 : i64, tpu.core_type = #tpu.core_type<tc>, window_params = [{transform_indices = @transform_0, window_bounds = array<i64: 16, 32>}, {transform_indices = @transform_1, window_bounds = array<i64: 32, 64>}, {transform_indices = @transform_2, window_bounds = array<i64: 1, 64>}, {transform_indices = @transform_3, window_bounds = array<i64: 16, 64>}]} {
    %c0_i32 = arith.constant 0 : i32
    %0 = arith.cmpi eq, %arg2, %c0_i32 : i32
    %1 = arith.extui %0 : i1 to i32
    %c0_i32_0 = arith.constant 0 : i32
    %2 = arith.cmpi ne, %1, %c0_i32_0 : i32
    scf.if %2 {
      %cst_10 = arith.constant 0.000000e+00 : f32
      %12 = vector.broadcast %cst_10 : f32 to vector<16x64xf32>
      %c0_11 = arith.constant 0 : index
      %c0_12 = arith.constant 0 : index
      %13 = vector.load %arg7[%c0_11, %c0_12] : memref<16x64xf32, #tpu.memory_space<vmem>>, vector<16x64xf32>
      tpu.vector_store %arg7[%c0_11, %c0_12], %12 {strides = array<i32>} : memref<16x64xf32, #tpu.memory_space<vmem>>, vector<16x64xf32>,
    } else {
    }
    %c0 = arith.constant 0 : index
    %c0_1 = arith.constant 0 : index
    %3 = vector.load %arg7[%c0, %c0_1] : memref<16x64xf32, #tpu.memory_space<vmem>>, vector<16x64xf32>
    %c0_2 = arith.constant 0 : index
    %c0_3 = arith.constant 0 : index
    %4 = vector.load %arg3[%c0_2, %c0_3] : memref<16x32xbf16, #tpu.memory_space<vmem>>, vector<16x32xbf16>
    %c0_4 = arith.constant 0 : index
    %c0_5 = arith.constant 0 : index
    %5 = vector.load %arg4[%c0_4, %c0_5] : memref<32x64xbf16, #tpu.memory_space<vmem>>, vector<32x64xbf16>
    %cst = arith.constant dense<0.000000e+00> : vector<16x64xf32>
    %6 = tpu.matmul %4, %5, %cst {dimension_numbers = #tpu.dot_dimension_numbers<[1], [0], [0], [1], [0, 0, 1, 1], [], []>} : vector<16x32xbf16>, vector<32x64xbf16>, vector<16x64xf32> -> vector<16x64xf32>
    %7 = arith.addf %3, %6 : vector<16x64xf32>
    %c0_6 = arith.constant 0 : index
    %c0_7 = arith.constant 0 : index
    %8 = vector.load %arg7[%c0_6, %c0_7] : memref<16x64xf32, #tpu.memory_space<vmem>>, vector<16x64xf32>
    tpu.vector_store %arg7[%c0_6, %c0_7], %7 {strides = array<i32>} : memref<16x64xf32, #tpu.memory_space<vmem>>, vector<16x64xf32>,
    %c0_i32_8 = arith.constant 0 : i32
    %9 = arith.cmpi eq, %arg2, %c0_i32_8 : i32
    %10 = arith.extui %9 : i1 to i32
    %c0_i32_9 = arith.constant 0 : i32
    %11 = arith.cmpi ne, %10, %c0_i32_9 : i32
    scf.if %11 {
      %c0_10 = arith.constant 0 : index
      %c0_11 = arith.constant 0 : index
      %12 = vector.load %arg7[%c0_10, %c0_11] : memref<16x64xf32, #tpu.memory_space<vmem>>, vector<16x64xf32>
      %c0_12 = arith.constant 0 : index
      %c0_13 = arith.constant 0 : index
      %13 = vector.load %arg5[%c0_12, %c0_13] : memref<1x64xf32, #tpu.memory_space<vmem>>, vector<1x64xf32>
      %14 = vector.broadcast %13 : vector<1x64xf32> to vector<16x64xf32>
      %15 = arith.addf %12, %14 : vector<16x64xf32>
      %cst_14 = arith.constant 5.000000e-01 : f32
      %16 = vector.broadcast %cst_14 : f32 to vector<16x64xf32>
      %17 = arith.mulf %16, %15 : vector<16x64xf32>
      %cst_15 = arith.constant 1.41421354 : f32
      %18 = vector.broadcast %cst_15 : f32 to vector<16x64xf32>
      %19 = arith.divf %15, %18 : vector<16x64xf32>
      %20 = math.erf %19 : vector<16x64xf32>
      %cst_16 = arith.constant 1.000000e+00 : f32
      %21 = vector.broadcast %cst_16 : f32 to vector<16x64xf32>
      %22 = arith.addf %21, %20 : vector<16x64xf32>
      %23 = arith.mulf %17, %22 : vector<16x64xf32>
      %c0_17 = arith.constant 0 : index
      %c0_18 = arith.constant 0 : index
      %24 = vector.load %arg6[%c0_17, %c0_18] : memref<16x64xf32, #tpu.memory_space<vmem>>, vector<16x64xf32>
      tpu.vector_store %arg6[%c0_17, %c0_18], %23 {strides = array<i32>} : memref<16x64xf32, #tpu.memory_space<vmem>>, vector<16x64xf32>,
    } else {
    }
    return
  }
  func.func @transform_0(%arg0: i32, %arg1: i32, %arg2: i32) -> (i32, i32) {
    %c0_i32 = arith.constant 0 : i32
    return %arg0, %arg2 : i32, i32
  }
  func.func @transform_1(%arg0: i32, %arg1: i32, %arg2: i32) -> (i32, i32) {
    %c0_i32 = arith.constant 0 : i32
    return %arg2, %arg1 : i32, i32
  }
  func.func @transform_2(%arg0: i32, %arg1: i32, %arg2: i32) -> (i32, i32) {
    %c0_i32 = arith.constant 0 : i32
    %c0_i32_0 = arith.constant 0 : i32
    return %c0_i32, %arg1 : i32, i32
  }
  func.func @transform_3(%arg0: i32, %arg1: i32, %arg2: i32) -> (i32, i32) {
    %c0_i32 = arith.constant 0 : i32
    return %arg0, %arg1 : i32, i32
  }
}

</mosaic_0001>

<llo_original>
// kernel: tpu_custom_call.1
$region0: #{tpu_custom_call.1}
  #allocation0 [shape = 'u32[]', space=smem, size = 0x4, offset = 0x4, fixed_abs, tag = 'smem constant byte address 0x4 - core index']
  #allocation1 [shape = 'u32[144,128]{1,0:T(1,128)}', space=vmem, size = 0x12000, scoped, tag = 'internal scratch']
  #allocation2 [shape = 'f32[16,64]{1,0:T(8,128)}', space=vmem, size = 0x2000, scoped, tag = 'scratch operand']
  %s0 = inlined_call_operand.hbm [shape: bf16[16,32], index: 0, kind: input, shape index: {}]
  %s1 = inlined_call_operand.hbm [shape: bf16[32,64], index: 1, kind: input, shape index: {}]
  %s2 = inlined_call_operand.hbm [shape: f32[1,64], index: 2, kind: input, shape index: {}]
  %s3 = inlined_call_operand.hbm [shape: f32[16,64], index: 3, kind: output, shape index: {}]
  %s4 = sld [smem:[#allocation0]]
  $region42: #{tpu_custom_call.1} parent=0
    _
  %s6 = ssub.s32 1, %s4
  %s7 = scalar_select 0, %s6, %s4
  $region1: #{tpu_custom_call.1} parent=0
    #allocation3 [shape = 'u8[4096]{0}', space=vmem, size = 0x1000, scoped, tag = 'input window, operand 0, single buffered']
    #allocation4 [shape = 's32[1]{0}', space=sflag, size = 0x4, scoped, tag = 'scoped memory for tpu_custom_call.1']
    #allocation5 [shape = 's32[1]{0}', space=sflag, size = 0x4, scoped, tag = 'scoped memory for tpu_custom_call.1']
    #allocation6 [shape = 'u8[8192]{0}', space=vmem, size = 0x2000, scoped, tag = 'input window, operand 1, single buffered']
    #allocation7 [shape = 's32[1]{0}', space=sflag, size = 0x4, scoped, tag = 'scoped memory for tpu_custom_call.1']
    #allocation8 [shape = 'u8[512]{0}', space=vmem, size = 0x400, scoped, tag = 'input window, operand 2, single buffered']
    #allocation9 [shape = 'u8[8192]{0}', space=vmem, size = 0x2000, scoped, tag = 'output window, operand 0, single buffered']
    %8 = vsyncpa [#allocation4], 0
    %9 = vsyncpa [#allocation7], 0
    %10 = vsyncpa [#allocation5], 0
    // Predicated region
    $region2: #{tpu_custom_call.1} parent=1 // pred_check
      _
    $region3: #{tpu_custom_call.1} parent=1 // pred_check_branch
      %12 = sbr.rel (0) target = $region5
    $region4: #{tpu_custom_call.1} parent=1 // pred_region
      %s14 = ssub.s32 128, 128
      %15 = vsyncadd [#allocation4], %s14
      %s16 = sshll.u32 [#allocation3], 4
      %s17 = int_to_ptr.vmem [resolvable:$true] %s16
      %22 = dma.hbm_to_vmem [thread:$0]  %s0, 128, %s17, [#allocation4], 64, 64, 4
    $region5: #{tpu_custom_call.1} parent=1 // pred_fallthru
      _
    // Predicated region
    $region6: #{tpu_custom_call.1} parent=1 // pred_check
      _
    $region7: #{tpu_custom_call.1} parent=1 // pred_check_branch
      %24 = sbr.rel (0) target = $region9
    $region8: #{tpu_custom_call.1} parent=1 // pred_region
      %s26 = ssub.s32 256, 256
      %27 = vsyncadd [#allocation7], %s26
      %s28 = sshll.u32 [#allocation6], 4
      %s29 = int_to_ptr.vmem [resolvable:$true] %s28
      %34 = dma.hbm_to_vmem [thread:$0]  %s1, 256, %s29, [#allocation7], 64, 64, 4
    $region9: #{tpu_custom_call.1} parent=1 // pred_fallthru
      _
    // Predicated region
    $region10: #{tpu_custom_call.1} parent=1 // pred_check
      _
    $region11: #{tpu_custom_call.1} parent=1 // pred_check_branch
      %36 = sbr.rel (0) target = $region13
    $region12: #{tpu_custom_call.1} parent=1 // pred_region
      %s38 = ssub.s32 16, 16
      %39 = vsyncadd [#allocation7], %s38
      %s41 = sshll.u32 [#allocation8], 4
      %s42 = int_to_ptr.vmem [resolvable:$true] %s41
      %44 = dma.hbm_to_vmem [thread:$0]  %s2, 16, %s42, [#allocation7]
    $region13: #{tpu_custom_call.1} parent=1 // pred_fallthru
      _
    // Predicated region
    $region14: #{tpu_custom_call.1} parent=1 // pred_check
      _
    $region15: #{tpu_custom_call.1} parent=1 // pred_check_branch
      %46 = sbr.rel (0) target = $region17
    $region16: #{tpu_custom_call.1} parent=1 // pred_region
      %47 = dma.done [#allocation4], 128
    $region17: #{tpu_custom_call.1} parent=1 // pred_fallthru
      _
    // Predicated region
    $region18: #{tpu_custom_call.1} parent=1 // pred_check
      _
    $region19: #{tpu_custom_call.1} parent=1 // pred_check_branch
      %49 = sbr.rel (0) target = $region21
    $region20: #{tpu_custom_call.1} parent=1 // pred_region
      %50 = dma.done [#allocation7], 256
    $region21: #{tpu_custom_call.1} parent=1 // pred_fallthru
      _
    // Predicated region
    $region22: #{tpu_custom_call.1} parent=1 // pred_check
      _
    $region23: #{tpu_custom_call.1} parent=1 // pred_check_branch
      %52 = sbr.rel (0) target = $region25
    $region24: #{tpu_custom_call.1} parent=1 // pred_region
      %53 = dma.done [#allocation7], 16
    $region25: #{tpu_custom_call.1} parent=1 // pred_fallthru
      _
    %p55 = scmp.eq.s32.totalorder 0, 0
    // Predicated region
    $region26: #{tpu_custom_call.1} parent=1 // pred_check
      %p56 = pneg %p55
    $region27: #{tpu_custom_call.1} parent=1 // pred_check_branch
      %58 = sbr.rel (%p56) target = $region29
    $region28: #{tpu_custom_call.1} parent=1 // pred_region
      %vm59 = vcmask 523264
      %60 = vst.msk [vmem:[#allocation2] sm:$0xff] %vm59, 0.0
      %61 = vst.msk [vmem:[#allocation2 + $0x8] sm:$0xff] %vm59, 0.0
    $region29: #{tpu_custom_call.1} parent=1 // pred_fallthru
      _
    %v62 = vld [vmem:[#allocation2] sm:$0xff]
    %v63 = vld [vmem:[#allocation2 + $0x8] sm:$0xff]
    %v64 = vld [vmem:[#allocation3] sm:$0xf]
    %v65 = vld [vmem:[#allocation3 + $0x4] sm:$0xf]
    %v66 = vld [vmem:[#allocation6] sm:$0xf]
    %v67 = vld [vmem:[#allocation6 + $0x4] sm:$0xf]
    %v68 = vld [vmem:[#allocation6 + $0x8] sm:$0xf]
    %v69 = vld [vmem:[#allocation6 + $0xc] sm:$0xf]
    %v72 = vunpack.c.l.b16 %v64
    %v73 = vunpack.c.l.b16 %v65
    %v74 = vpack.c.b16 %v73, %v72
    %v79 = vunpack.c.l.b16 %v66
    %v80 = vunpack.c.l.b16 %v67
    %v81 = vunpack.c.l.b16 %v68
    %v82 = vunpack.c.l.b16 %v69
    %v83 = vpack.c.b16 %v80, %v79
    %v84 = vpack.c.b16 %v82, %v81
    %vm87 = vcmask 261120
    %v89 = vsel %vm87, %v74, 0
    %91 = vmatprep.subr.bf16.mxu0 0
    %92 = vmatpush1.bf16.msra.mxu0 %v83
    %93 = vmatprep.subr.bf16.mxu0 0
    %94 = vmatpush1.bf16.msra.mxu0 %v84
    %95 = vmatprep.subr.bf16.mxu0 0
    %96 = vmatpush1.bf16.msra.mxu0 0
    %97 = vmatprep.subr.bf16.mxu0 0
    %98 = vmatpush1.bf16.msra.mxu0 0
    %99 = vmatprep.subr.bf16.mxu0 0
    %100 = vmatpush1.bf16.msra.mxu0 0
    %101 = vmatprep.subr.bf16.mxu0 0
    %102 = vmatpush1.bf16.msra.mxu0 0
    %103 = vmatprep.subr.bf16.mxu0 0
    %104 = vmatpush1.bf16.msra.mxu0 0
    %105 = vmatprep.subr.bf16.mxu0 0
    %106 = vmatpush1.bf16.msra.mxu0 0
    %107 = vmatprep.subr.bf16.mxu0 0
    %108 = vmatpush1.bf16.msra.mxu0 0
    %109 = vmatprep.subr.bf16.mxu0 0
    %110 = vmatpush1.bf16.msra.mxu0 0
    %111 = vmatprep.subr.bf16.mxu0 0
    %112 = vmatpush1.bf16.msra.mxu0 0
    %113 = vmatprep.subr.bf16.mxu0 0
    %114 = vmatpush1.bf16.msra.mxu0 0
    %115 = vmatprep.subr.bf16.mxu0 0
    %116 = vmatpush1.bf16.msra.mxu0 0
    %117 = vmatprep.subr.bf16.mxu0 0
    %118 = vmatpush1.bf16.msra.mxu0 0
    %119 = vmatprep.subr.bf16.mxu0 0
    %120 = vmatpush1.bf16.msra.mxu0 0
    %121 = vmatprep.subr.bf16.mxu0 0
    %122 = vmatpush1.bf16.msra.mxu0 0
    %123 = vmatprep.mubr.bf16.mxu0 0
    %124 = vmatmul.mubr.bf16.gmra.mrb[0].mxu0 %v89
    %v125 = vpop.f32.mrb[0].mxu0
    %v126 = vadd.f32 0.0, %v125
    %v127 = vpop.f32.mrb[0].mxu0
    %v128 = vpop.f32.mrb[0].mxu0
    %v129 = vadd.f32 0.0, %v128
    %v130 = vpop.f32.mrb[0].mxu0
    %131 = vdwg.mxu0
    %v132 = vadd.f32 %v62, %v126
    %v133 = vadd.f32 %v63, %v129
    %vm134 = vcmask 523264
    %135 = vst.msk [vmem:[#allocation2] sm:$0xff] %vm134, %v132
    %136 = vst.msk [vmem:[#allocation2 + $0x8] sm:$0xff] %vm134, %v133
    // Predicated region
    $region30: #{tpu_custom_call.1} parent=1 // pred_check
      %p137 = pneg %p55
    $region31: #{tpu_custom_call.1} parent=1 // pred_check_branch
      %139 = sbr.rel (%p137) target = $region33
    $region32: #{tpu_custom_call.1} parent=1 // pred_region
      %v140 = vld [vmem:[#allocation2] sm:$0xff]
      %v141 = vld [vmem:[#allocation2 + $0x8] sm:$0xff]
      %v142 = vld [vmem:[#allocation8] sm:$0x1]
      %v144 = vlaneseq
      %v145 = vshrl.u32 %v144, 7
      %v146 = vsub.s32 0, %v145
      %v147 = vrot.slane %v142, %v146
      %v149 = vadd.f32 %v140, %v147
      %v150 = vadd.f32 %v141, %v147
      %v151 = vmul.f32 %v149, 0.5
      %v152 = vmul.f32 %v150, 0.5
      %v153 = vrcp.pop 1.4142135
      %v154 = vmul.f32 %v149, %v153
      %v155 = vmul.f32 %v150, %v153
      %v156 = verf.f32.pop %v154
      %v157 = verf.f32.pop %v155
      %v158 = vadd.f32 %v156, 1.0
      %v159 = vadd.f32 %v157, 1.0
      %v160 = vmul.f32 %v151, %v158
      %v161 = vmul.f32 %v152, %v159
      %162 = vst.msk [vmem:[#allocation9] sm:$0xff] %vm134, %v160
      %163 = vst.msk [vmem:[#allocation9 + $0x8] sm:$0xff] %vm134, %v161
    $region33: #{tpu_custom_call.1} parent=1 // pred_fallthru
      _
    // Predicated region
    $region34: #{tpu_custom_call.1} parent=1 // pred_check
      _
    $region35: #{tpu_custom_call.1} parent=1 // pred_check_branch
      %165 = sbr.rel (0) target = $region37
    $region36: #{tpu_custom_call.1} parent=1 // pred_region
      %s167 = ssub.s32 256, 256
      %168 = vsyncadd [#allocation5], %s167
      %s169 = sshll.u32 [#allocation9], 4
      %s170 = int_to_ptr.vmem [resolvable:$true] %s169
      %175 = dma.vmem_to_hbm [thread:$0]  %s170, 256, %s3, [#allocation5], 128, 128, 8
    $region37: #{tpu_custom_call.1} parent=1 // pred_fallthru
      _
    // Predicated region
    $region38: #{tpu_custom_call.1} parent=1 // pred_check
      _
    $region39: #{tpu_custom_call.1} parent=1 // pred_check_branch
      %177 = sbr.rel (0) target = $region41
    $region40: #{tpu_custom_call.1} parent=1 // pred_region
      %178 = dma.done [#allocation5], 256
    $region41: #{tpu_custom_call.1} parent=1 // pred_fallthru
      _
    %179 = vsyncpa [#allocation4], 1
    %180 = vsyncpa [#allocation7], 1
    %181 = vsyncpa [#allocation5], 1

</llo_original>
